<compile_context>
chip_gen: v5e
topology: v5e:2x2
jax: 0.10.0
libtpu: 0.0.40
codegen_flags: <defaults>
</compile_context>

<pallas_src>
import math

import jax
import jax.numpy as jnp
from jax.experimental import pallas as pl
from jax.experimental.pallas import tpu as pltpu


def critic_kernel(x_ref, w1_ref, b1_ref, w2t_ref, b2_ref, w3_ref, lb3_ref,
                  out_ref, acc_ref):
    L = x_ref.shape[0]
    cdt = x_ref.dtype                        # compute dtype chosen by the wrapper

    # Tiny resident weights: cast once per tile (hoisted out of the l-loop).
    w1 = w1_ref[...].astype(cdt)             # (H, 1)
    b1 = b1_ref[...].astype(cdt)             # (H, 1)
    w2 = w2t_ref[...].astype(cdt)            # (20, H)
    b2 = b2_ref[...]                         # (20, 1) f32

    acc_ref[...] = jnp.zeros_like(acc_ref)   # (20, TB) f32 accumulator over L

    @pl.loop(0, L)
    def _(l):
        x_l = x_ref[pl.ds(l, 1), :]                          # (1, TB)  batch on lanes
        h1 = jnp.maximum(w1 * x_l + b1, 0.0)                 # (H, TB)  fc1 + relu (VPU)
        h2 = jnp.dot(w2, h1,                                 # (20, TB) fc2 on the MXU
                     preferred_element_type=jnp.float32)
        acc_ref[...] += jnp.maximum(h2 + b2, 0.0)            # relu + sum over L (f32)

    # fc3 applied once to the L-summed activations (fc3 is linear):
    #   out[b] = sum_c w3[c] * sum_l h2[b, c, l] + L * fc3.bias
    out_ref[...] = (jnp.sum(acc_ref[...] * w3_ref[...], axis=0, keepdims=True)
                    + lb3_ref[...])                          # (1, TB) lane-dense


def _choose_tile(B, L, H, itemsize, budget_bytes):
    """Batch-tile lane width TB (multiple of 128) from the true per-lane-column VMEM
    footprint (x block, h1/h2 temporaries with H, accumulator), plus padded B."""
    per_col = (2 * L * itemsize          # x block (double-buffered)
               + 24 * 4                  # (20, TB) f32 accumulator (sublane-padded)
               + H * (itemsize + 4)      # live h1 (+ slack for f32 temporaries)
               + 24 * 4                  # live h2 (f32)
               + 2 * 4)                  # (1, TB) output block (double-buffered)
    tb = max(128, (budget_bytes // per_col) // 128 * 128)
    tb = min(tb, 32768)                  # keep lane extents sane for huge B
    b_lanes = pl.cdiv(B, 128) * 128
    if tb >= b_lanes:
        tb = b_lanes
        if b_lanes >= 1024:              # keep >=2 grid steps so both v7x TCs get work
            tb = pl.cdiv(b_lanes // 2, 128) * 128
    b_pad = pl.cdiv(B, tb) * tb
    # Note: for extremely long sequences (L >~ 1e5) the (L, TB) x block itself would
    # outgrow VMEM; such L is far outside this module's use and is not tiled further.
    return int(tb), int(b_pad), int(per_col)


def critic_forward(x, params, *, compute_dtype=jnp.bfloat16,
                   vmem_budget_bytes=20 << 20):
    """x: (B, L) float log-probs. Returns (B, 1) float32, matching Critic.forward."""
    w1, b1, w2t, b2, w3, b3 = params
    B, L = x.shape
    H = w1.shape[0]

    itemsize = jnp.dtype(compute_dtype).itemsize
    TB, B_pad, per_col = _choose_tile(B, L, H, itemsize, vmem_budget_bytes)
    grid = (B_pad // TB,)

    # Layout plumbing (tiny XLA ops): batch on lanes, padded to the tile width.
    xt = jnp.asarray(x, compute_dtype).T                   # (L, B)
    if B_pad != B:
        xt = jnp.pad(xt, ((0, 0), (0, B_pad - B)))
    lb3 = jnp.float32(L) * b3.astype(jnp.float32)          # (1, 1): L * fc3.bias

    flops = B * L * (3 * H + 2 * 20 * H + 3 * 20) + B * 2 * 20
    bytes_accessed = itemsize * B_pad * L + 4 * (B_pad + 2 * H + 20 * H + 2 * 20 + 1)

    def resident(shape):
        return pl.BlockSpec(shape, lambda i: (0,) * len(shape))

    out = pl.pallas_call(
        critic_kernel,
        out_shape=jax.ShapeDtypeStruct((1, B_pad), jnp.float32),
        grid_spec=pltpu.PrefetchScalarGridSpec(
            num_scalar_prefetch=0,
            grid=grid,
            in_specs=[
                pl.BlockSpec((L, TB), lambda i: (0, i)),   # x^T: batch lane-dense
                resident((H, 1)),                          # fc1 weight
                resident((H, 1)),                          # fc1 bias
                resident((20, H)),                         # fc2 weight (C_out, C_in)
                resident((20, 1)),                         # fc2 bias
                resident((20, 1)),                         # fc3 weight
                resident((1, 1)),                          # L * fc3 bias
            ],
            out_specs=pl.BlockSpec((1, TB), lambda i: (0, i)),
            scratch_shapes=[pltpu.VMEM((20, TB), jnp.float32)],
        ),
        compiler_params=pltpu.CompilerParams(
            dimension_semantics=("parallel",),
            vmem_limit_bytes=int(min(48 << 20, max(32 << 20, 2 * per_col * TB))),
        ),
        cost_estimate=pl.CostEstimate(
            flops=flops, transcendentals=0, bytes_accessed=bytes_accessed),
    )(xt, w1, b1, w2t, b2, w3, lb3)

    return out[0, :B][:, None]


def init_critic_params(key, hidden_size):
    """Parameters matching the nn.Conv1d shapes, stored in kernel-friendly layouts:
         fc1.weight (H,1,1)  -> w1 (H,1);   fc1.bias (H,)  -> b1 (H,1)
         fc2.weight (20,H,1) -> w2 (20,H);  fc2.bias (20,) -> b2 (20,1)
         fc3.weight (1,20,1) -> w3 (20,1);  fc3.bias (1,)  -> b3 (1,1)
       Weights: xavier_uniform (as in the module); biases: PyTorch Conv1d default.
    """
    H = hidden_size
    ks = jax.random.split(key, 6)

    def xavier(k, fan_in, fan_out, shape):
        bound = math.sqrt(6.0 / (fan_in + fan_out))
        return jax.random.uniform(k, shape, jnp.float32, -bound, bound)

    def bias(k, fan_in, shape):
        bound = 1.0 / math.sqrt(fan_in)
        return jax.random.uniform(k, shape, jnp.float32, -bound, bound)

    w1 = xavier(ks[0], 1, H, (H, 1))
    b1 = bias(ks[1], 1, (H, 1))
    w2 = xavier(ks[2], H, 20, (20, H))
    b2 = bias(ks[3], H, (20, 1))
    w3 = xavier(ks[4], 20, 1, (20, 1))
    b3 = bias(ks[5], 20, (1, 1))
    return (w1, b1, w2, b2, w3, b3)


def critic_reference(x, params):
    """Pure-JAX transcription of Critic.forward (exact f32, no matmul-precision
    ambiguity), for verification."""
    w1, b1, w2t, b2, w3, b3 = params
    B, L = x.shape
    xf = x.reshape(B * L, 1).astype(jnp.float32)                          # (N, 1)
    h1 = jnp.maximum(xf * w1[:, 0][None, :] + b1[:, 0][None, :], 0.0)     # (N, H)
    h2 = jnp.maximum((h1[:, None, :] * w2t[None, :, :]).sum(-1)
                     + b2[:, 0][None, :], 0.0)                            # (N, 20)
    y = (h2 * w3[:, 0][None, :]).sum(-1) + b3[0, 0]                       # (N,)
    return y.reshape(B, L).sum(axis=1, keepdims=True)                     # (B, 1)


if __name__ == "__main__":
    hidden_size = 32
    B, L = 2, 8

    key = jax.random.PRNGKey(0)
    k_x, k_p = jax.random.split(key)
    x = jax.random.normal(k_x, (B, L), dtype=jnp.float32)
    params = init_critic_params(k_p, hidden_size)

    ref = critic_reference(x, params)

    # f32 path (exact-parity configuration).
    out_f32 = jax.block_until_ready(
        critic_forward(x, params, compute_dtype=jnp.float32))
    assert out_f32.shape == (B, 1), out_f32.shape
    assert jnp.allclose(out_f32, ref, atol=5e-2, rtol=5e-2), (out_f32, ref)

    # Default path: bf16 fc1 / MXU operands, f32 accumulation (looser tolerance).
    out = jax.block_until_ready(critic_forward(x, params))
    assert out.shape == (B, 1), out.shape
    assert jnp.allclose(out, ref, atol=1.5e-1, rtol=1e-1), (out, ref)

    print("KERNEL_OK")
</pallas_src>

<mosaic_0001>
module attributes {stable_mosaic.version = 11 : i64} {
  func.func @critic_kernel(%arg0: i32, %arg1: memref<8x128xf32, #tpu.memory_space<vmem>>, %arg2: memref<32x1xf32, #tpu.memory_space<vmem>>, %arg3: memref<32x1xf32, #tpu.memory_space<vmem>>, %arg4: memref<20x32xf32, #tpu.memory_space<vmem>>, %arg5: memref<20x1xf32, #tpu.memory_space<vmem>>, %arg6: memref<20x1xf32, #tpu.memory_space<vmem>>, %arg7: memref<1x1xf32, #tpu.memory_space<vmem>>, %arg8: memref<1x128xf32, #tpu.memory_space<vmem>>, %arg9: memref<20x128xf32, #tpu.memory_space<vmem>>) attributes {dimension_semantics = [#tpu.dimension_semantics<parallel>], iteration_bounds = array<i64: 1>, scalar_prefetch = 0 : i64, scratch_operands = 1 : i64, tpu.core_type = #tpu.core_type<tc>, window_params = [{transform_indices = @transform_0, window_bounds = array<i64: 8, 128>}, {pipeline_mode = #tpu.pipeline_mode<synchronous>, transform_indices = @transform_1, window_bounds = array<i64: 32, 1>}, {pipeline_mode = #tpu.pipeline_mode<synchronous>, transform_indices = @transform_2, window_bounds = array<i64: 32, 1>}, {pipeline_mode = #tpu.pipeline_mode<synchronous>, transform_indices = @transform_3, window_bounds = array<i64: 20, 32>}, {pipeline_mode = #tpu.pipeline_mode<synchronous>, transform_indices = @transform_4, window_bounds = array<i64: 20, 1>}, {pipeline_mode = #tpu.pipeline_mode<synchronous>, transform_indices = @transform_5, window_bounds = array<i64: 20, 1>}, {pipeline_mode = #tpu.pipeline_mode<synchronous>, transform_indices = @transform_6, window_bounds = array<i64: 1, 1>}, {transform_indices = @transform_7, window_bounds = array<i64: 1, 128>}]} {
    %c0 = arith.constant 0 : index
    %c0_0 = arith.constant 0 : index
    %0 = vector.load %arg2[%c0, %c0_0] : memref<32x1xf32, #tpu.memory_space<vmem>>, vector<32x1xf32>
    %c0_1 = arith.constant 0 : index
    %c0_2 = arith.constant 0 : index
    %1 = vector.load %arg3[%c0_1, %c0_2] : memref<32x1xf32, #tpu.memory_space<vmem>>, vector<32x1xf32>
    %c0_3 = arith.constant 0 : index
    %c0_4 = arith.constant 0 : index
    %2 = vector.load %arg4[%c0_3, %c0_4] : memref<20x32xf32, #tpu.memory_space<vmem>>, vector<20x32xf32>
    %c0_5 = arith.constant 0 : index
    %c0_6 = arith.constant 0 : index
    %3 = vector.load %arg5[%c0_5, %c0_6] : memref<20x1xf32, #tpu.memory_space<vmem>>, vector<20x1xf32>
    %cst = arith.constant 0.000000e+00 : f32
    %4 = vector.broadcast %cst : f32 to vector<20x128xf32>
    %c0_7 = arith.constant 0 : index
    %c0_8 = arith.constant 0 : index
    %5 = vector.load %arg9[%c0_7, %c0_8] : memref<20x128xf32, #tpu.memory_space<vmem>>, vector<20x128xf32>
    tpu.vector_store %arg9[%c0_7, %c0_8], %4 {strides = array<i32>} : memref<20x128xf32, #tpu.memory_space<vmem>>, vector<20x128xf32>,
    %c0_i32 = arith.constant 0 : i32
    %c8_i32 = arith.constant 8 : i32
    %6 = arith.addi %c0_i32, %c8_i32 : i32
    %c1_i32 = arith.constant 1 : i32
    scf.for %arg10 = %c0_i32 to %6 step %c1_i32  : i32 {
      %c1_i32_19 = arith.constant 1 : i32
      %17 = arith.muli %arg10, %c1_i32_19 : i32
      %c0_i32_20 = arith.constant 0 : i32
      %18 = arith.addi %c0_i32_20, %17 : i32
      %19 = arith.index_cast %18 : i32 to index
      %c0_21 = arith.constant 0 : index
      %20 = vector.load %arg1[%19, %c0_21] : memref<8x128xf32, #tpu.memory_space<vmem>>, vector<1x128xf32>
      %21 = vector.broadcast %0 : vector<32x1xf32> to vector<32x128xf32>
      %22 = vector.broadcast %20 : vector<1x128xf32> to vector<32x128xf32>
      %23 = arith.mulf %21, %22 : vector<32x128xf32>
      %24 = vector.broadcast %1 : vector<32x1xf32> to vector<32x128xf32>
      %25 = arith.addf %23, %24 : vector<32x128xf32>
      %cst_22 = arith.constant 0.000000e+00 : f32
      %26 = vector.broadcast %cst_22 : f32 to vector<32x128xf32>
      %27 = arith.maximumf %25, %26 : vector<32x128xf32>
      %cst_23 = arith.constant dense<0.000000e+00> : vector<20x128xf32>
      %28 = tpu.matmul %2, %27, %cst_23 {dimension_numbers = #tpu.dot_dimension_numbers<[1], [0], [0], [1], [0, 0, 1, 1], [], []>} : vector<20x32xf32>, vector<32x128xf32>, vector<20x128xf32> -> vector<20x128xf32>
      %c0_24 = arith.constant 0 : index
      %c0_25 = arith.constant 0 : index
      %29 = vector.load %arg9[%c0_24, %c0_25] : memref<20x128xf32, #tpu.memory_space<vmem>>, vector<20x128xf32>
      %30 = vector.broadcast %3 : vector<20x1xf32> to vector<20x128xf32>
      %31 = arith.addf %28, %30 : vector<20x128xf32>
      %cst_26 = arith.constant 0.000000e+00 : f32
      %32 = vector.broadcast %cst_26 : f32 to vector<20x128xf32>
      %33 = arith.maximumf %31, %32 : vector<20x128xf32>
      %34 = arith.addf %29, %33 : vector<20x128xf32>
      %c0_27 = arith.constant 0 : index
      %c0_28 = arith.constant 0 : index
      %35 = vector.load %arg9[%c0_27, %c0_28] : memref<20x128xf32, #tpu.memory_space<vmem>>, vector<20x128xf32>
      tpu.vector_store %arg9[%c0_27, %c0_28], %34 {strides = array<i32>} : memref<20x128xf32, #tpu.memory_space<vmem>>, vector<20x128xf32>,
    }
    %c8_i32_9 = arith.constant 8 : i32
    %c0_10 = arith.constant 0 : index
    %c0_11 = arith.constant 0 : index
    %7 = vector.load %arg9[%c0_10, %c0_11] : memref<20x128xf32, #tpu.memory_space<vmem>>, vector<20x128xf32>
    %c0_12 = arith.constant 0 : index
    %c0_13 = arith.constant 0 : index
    %8 = vector.load %arg6[%c0_12, %c0_13] : memref<20x1xf32, #tpu.memory_space<vmem>>, vector<20x1xf32>
    %9 = vector.broadcast %8 : vector<20x1xf32> to vector<20x128xf32>
    %10 = arith.mulf %7, %9 : vector<20x128xf32>
    %cst_14 = arith.constant dense<0.000000e+00> : vector<128xf32>
    %11 = vector.multi_reduction <add>, %10, %cst_14 [0] : vector<20x128xf32> to vector<128xf32>
    %12 = vector.shape_cast %11 : vector<128xf32> to vector<1x128xf32>
    %c0_15 = arith.constant 0 : index
    %c0_16 = arith.constant 0 : index
    %13 = vector.load %arg7[%c0_15, %c0_16] : memref<1x1xf32, #tpu.memory_space<vmem>>, vector<1x1xf32>
    %14 = vector.broadcast %13 : vector<1x1xf32> to vector<1x128xf32>
    %15 = arith.addf %12, %14 : vector<1x128xf32>
    %c0_17 = arith.constant 0 : index
    %c0_18 = arith.constant 0 : index
    %16 = vector.load %arg8[%c0_17, %c0_18] : memref<1x128xf32, #tpu.memory_space<vmem>>, vector<1x128xf32>
    tpu.vector_store %arg8[%c0_17, %c0_18], %15 {strides = array<i32>} : memref<1x128xf32, #tpu.memory_space<vmem>>, vector<1x128xf32>,
    return
  }
  func.func @transform_0(%arg0: i32) -> (i32, i32) {
    %c0_i32 = arith.constant 0 : i32
    %c0_i32_0 = arith.constant 0 : i32
    return %c0_i32, %arg0 : i32, i32
  }
  func.func @transform_1(%arg0: i32) -> (i32, i32) {
    %c0_i32 = arith.constant 0 : i32
    %c0_i32_0 = arith.constant 0 : i32
    %c0_i32_1 = arith.constant 0 : i32
    return %c0_i32, %c0_i32_0 : i32, i32
  }
  func.func @transform_2(%arg0: i32) -> (i32, i32) {
    %c0_i32 = arith.constant 0 : i32
    %c0_i32_0 = arith.constant 0 : i32
    %c0_i32_1 = arith.constant 0 : i32
    return %c0_i32, %c0_i32_0 : i32, i32
  }
  func.func @transform_3(%arg0: i32) -> (i32, i32) {
    %c0_i32 = arith.constant 0 : i32
    %c0_i32_0 = arith.constant 0 : i32
    %c0_i32_1 = arith.constant 0 : i32
    return %c0_i32, %c0_i32_0 : i32, i32
  }
  func.func @transform_4(%arg0: i32) -> (i32, i32) {
    %c0_i32 = arith.constant 0 : i32
    %c0_i32_0 = arith.constant 0 : i32
    %c0_i32_1 = arith.constant 0 : i32
    return %c0_i32, %c0_i32_0 : i32, i32
  }
  func.func @transform_5(%arg0: i32) -> (i32, i32) {
    %c0_i32 = arith.constant 0 : i32
    %c0_i32_0 = arith.constant 0 : i32
    %c0_i32_1 = arith.constant 0 : i32
    return %c0_i32, %c0_i32_0 : i32, i32
  }
  func.func @transform_6(%arg0: i32) -> (i32, i32) {
    %c0_i32 = arith.constant 0 : i32
    %c0_i32_0 = arith.constant 0 : i32
    %c0_i32_1 = arith.constant 0 : i32
    return %c0_i32, %c0_i32_0 : i32, i32
  }
  func.func @transform_7(%arg0: i32) -> (i32, i32) {
    %c0_i32 = arith.constant 0 : i32
    %c0_i32_0 = arith.constant 0 : i32
    return %c0_i32, %arg0 : i32, i32
  }
}

</mosaic_0001>

<llo_original>
// kernel: tpu_custom_call.1
$region0: #{tpu_custom_call.1}
  #allocation0 [shape = 'u32[]', space=smem, size = 0x4, offset = 0x4, fixed_abs, tag = 'smem constant byte address 0x4 - core index']
  #allocation1 [shape = 'u32[72,128]{1,0:T(1,128)}', space=vmem, size = 0x9000, scoped, tag = 'internal scratch']
  #allocation2 [shape = 'f32[20,128]{1,0:T(8,128)}', space=vmem, size = 0x3000, scoped, tag = 'scratch operand']
  #allocation3 [shape = 'f32[1,1]{1,0:T(1,128)S(1)}', space=vmem, size = 0x200, scoped, tag = 'scoped memory for tpu_custom_call.1']
  %s0 = inlined_call_operand.vmem [shape: f32[8,128], index: 0, kind: input, shape index: {}]
  %s1 = inlined_call_operand.vmem [shape: f32[32,1], index: 1, kind: input, shape index: {}]
  %s2 = inlined_call_operand.vmem [shape: f32[32,1], index: 2, kind: input, shape index: {}]
  %s3 = inlined_call_operand.vmem [shape: f32[20,32], index: 3, kind: input, shape index: {}]
  %s4 = inlined_call_operand.vmem [shape: f32[20,1], index: 4, kind: input, shape index: {}]
  %s5 = inlined_call_operand.vmem [shape: f32[20,1], index: 5, kind: input, shape index: {}]
  %s6 = inlined_call_operand.<no memory space> [shape: f32[1,1], index: 6, kind: input, shape index: {}]
  %s7 = inlined_call_operand.hbm [shape: f32[1,128], index: 7, kind: output, shape index: {}]
  %s8 = sld [smem:[#allocation0]]
  $region45: #{tpu_custom_call.1} parent=0
    _
  %s10 = ssub.s32 1, %s8
  %s11 = scalar_select 0, %s10, %s8
  %v12 = vstv %s6
  %13 = vst [vmem:[#allocation3] sm:$0x1] %v12
  $region1: #{tpu_custom_call.1} parent=0
    #allocation4 [shape = 'u8[512]{0}', space=vmem, size = 0x400, scoped, tag = 'output window, operand 0, single buffered']
    #allocation5 [shape = 's32[1]{0}', space=sflag, size = 0x4, scoped, tag = 'scoped memory for tpu_custom_call.1']
    %14 = vsyncpa [#allocation5], 0
    // Predicated region
    $region2: #{tpu_custom_call.1} parent=1 // pred_check
      _
    $region3: #{tpu_custom_call.1} parent=1 // pred_check_branch
      %16 = sbr.rel (0) target = $region5
    $region4: #{tpu_custom_call.1} parent=1 // pred_region
      _
    $region5: #{tpu_custom_call.1} parent=1 // pred_fallthru
      _
    // Predicated region
    $region6: #{tpu_custom_call.1} parent=1 // pred_check
      _
    $region7: #{tpu_custom_call.1} parent=1 // pred_check_branch
      %18 = sbr.rel (0) target = $region9
    $region8: #{tpu_custom_call.1} parent=1 // pred_region
      _
    $region9: #{tpu_custom_call.1} parent=1 // pred_fallthru
      _
    // Predicated region
    $region10: #{tpu_custom_call.1} parent=1 // pred_check
      _
    $region11: #{tpu_custom_call.1} parent=1 // pred_check_branch
      %20 = sbr.rel (0) target = $region13
    $region12: #{tpu_custom_call.1} parent=1 // pred_region
      _
    $region13: #{tpu_custom_call.1} parent=1 // pred_fallthru
      _
    // Predicated region
    $region14: #{tpu_custom_call.1} parent=1 // pred_check
      _
    $region15: #{tpu_custom_call.1} parent=1 // pred_check_branch
      %22 = sbr.rel (0) target = $region17
    $region16: #{tpu_custom_call.1} parent=1 // pred_region
      _
    $region17: #{tpu_custom_call.1} parent=1 // pred_fallthru
      _
    // Predicated region
    $region18: #{tpu_custom_call.1} parent=1 // pred_check
      _
    $region19: #{tpu_custom_call.1} parent=1 // pred_check_branch
      %24 = sbr.rel (0) target = $region21
    $region20: #{tpu_custom_call.1} parent=1 // pred_region
      _
    $region21: #{tpu_custom_call.1} parent=1 // pred_fallthru
      _
    // Predicated region
    $region22: #{tpu_custom_call.1} parent=1 // pred_check
      _
    $region23: #{tpu_custom_call.1} parent=1 // pred_check_branch
      %26 = sbr.rel (0) target = $region25
    $region24: #{tpu_custom_call.1} parent=1 // pred_region
      _
    $region25: #{tpu_custom_call.1} parent=1 // pred_fallthru
      _
    // Predicated region
    $region26: #{tpu_custom_call.1} parent=1 // pred_check
      _
    $region27: #{tpu_custom_call.1} parent=1 // pred_check_branch
      %28 = sbr.rel (0) target = $region29
    $region28: #{tpu_custom_call.1} parent=1 // pred_region
      _
    $region29: #{tpu_custom_call.1} parent=1 // pred_fallthru
      _
    %v29 = vld [vmem:[%s1] sm:$0xff]
    %v30 = vld [vmem:[%s1 + $0x8] sm:$0xff]
    %v31 = vld [vmem:[%s1 + $0x10] sm:$0xff]
    %v32 = vld [vmem:[%s1 + $0x18] sm:$0xff]
    %v33 = vld [vmem:[%s2] sm:$0xff]
    %v34 = vld [vmem:[%s2 + $0x8] sm:$0xff]
    %v35 = vld [vmem:[%s2 + $0x10] sm:$0xff]
    %v36 = vld [vmem:[%s2 + $0x18] sm:$0xff]
    %v37 = vld [vmem:[%s3] sm:$0xff]
    %v38 = vld [vmem:[%s3 + $0x8] sm:$0xff]
    %v39 = vld [vmem:[%s3 + $0x10] sm:$0xf]
    %v40 = vld [vmem:[%s4] sm:$0xff]
    %v41 = vld [vmem:[%s4 + $0x8] sm:$0xff]
    %v42 = vld [vmem:[%s4 + $0x10] sm:$0xf]
    %43 = vst [vmem:[#allocation2] sm:$0xff] 0.0
    %44 = vst [vmem:[#allocation2 + $0x8] sm:$0xff] 0.0
    %45 = vst [vmem:[#allocation2 + $0x10] sm:$0xf] 0.0
    loop: start=0, step=1, limit=8
    $region30: #{tpu_custom_call.1} parent=1 // loop_pre_header
      _
    $region31: #{tpu_custom_call.1} parent=1 // loop_header
      %s47 = sphi 0, %s51
      %p48 = scmp.ge.s32.totalorder %s47, 8
    $region32: #{tpu_custom_call.1} parent=1 // loop_header_branch
      %50 = sbr.rel (%p48) target = $region36
    $region33: #{tpu_custom_call.1} parent=1 // loop_body
      %s52 = scalar_lea.vmem %s0, %s47
      %v53 = vld [vmem:[%s52] sm:$0x1]
      %55 = vset.pattern.permute.xlu0 0
      %56 = vperm.xlu0 %55, %v29
      %v57 = vpop.permute.xlu0 %56
      %60 = vset.pattern.permute.xlu0 0
      %61 = vperm.xlu0 %60, %v30
      %v62 = vpop.permute.xlu0 %61
      %65 = vset.pattern.permute.xlu0 0
      %66 = vperm.xlu0 %65, %v31
      %v67 = vpop.permute.xlu0 %66
      %70 = vset.pattern.permute.xlu0 0
      %71 = vperm.xlu0 %70, %v32
      %v72 = vpop.permute.xlu0 %71
      %v74 = vperm.slane %v53, 0
      %v75 = vmul.f32 %v57, %v74
      %v76 = vmul.f32 %v62, %v74
      %v77 = vmul.f32 %v67, %v74
      %v78 = vmul.f32 %v72, %v74
      %80 = vset.pattern.permute.xlu0 0
      %81 = vperm.xlu0 %80, %v33
      %v82 = vpop.permute.xlu0 %81
      %85 = vset.pattern.permute.xlu0 0
      %86 = vperm.xlu0 %85, %v34
      %v87 = vpop.permute.xlu0 %86
      %90 = vset.pattern.permute.xlu0 0
      %91 = vperm.xlu0 %90, %v35
      %v92 = vpop.permute.xlu0 %91
      %95 = vset.pattern.permute.xlu0 0
      %96 = vperm.xlu0 %95, %v36
      %v97 = vpop.permute.xlu0 %96
      %v99 = vadd.f32 %v75, %v82
      %v100 = vadd.f32 %v76, %v87
      %v101 = vadd.f32 %v77, %v92
      %v102 = vadd.f32 %v78, %v97
      %v103 = vmax.f32 %v99, 0.0
      %v104 = vmax.f32 %v100, 0.0
      %v105 = vmax.f32 %v101, 0.0
      %v106 = vmax.f32 %v102, 0.0
      %v107 = vld [vmem:[#allocation2] sm:$0xff]
      %v108 = vld [vmem:[#allocation2 + $0x8] sm:$0xff]
      %v109 = vld [vmem:[#allocation2 + $0x10] sm:$0xf]
      %111 = vset.pattern.permute.xlu0 0
      %112 = vperm.xlu0 %111, %v40
      %v113 = vpop.permute.xlu0 %112
      %116 = vset.pattern.permute.xlu0 0
      %117 = vperm.xlu0 %116, %v41
      %v118 = vpop.permute.xlu0 %117
      %121 = vset.pattern.permute.xlu0 0
      %122 = vperm.xlu0 %121, %v42
      %v123 = vpop.permute.xlu0 %122
      %vm125 = vcmask 261120
      %v127 = vsel %vm125, %v37, 0
      %v130 = vsel %vm125, %v38, 0
      %v133 = vsel %vm125, %v39, 0
      %135 = vmatpush.msra.mxu0 0.0
      %136 = vmatpush.msra.mxu0 0.0
      %137 = vmatpush.msra.mxu0 0.0
      %138 = vmatpush.msra.mxu0 0.0
      %139 = vmatpush.msra.mxu0 0.0
      %140 = vmatpush.msra.mxu0 0.0
      %141 = vmatpush.msra.mxu0 0.0
      %142 = vmatpush.msra.mxu0 0.0
      %143 = vmatpush.msra.mxu0 0.0
      %144 = vmatpush.msra.mxu0 0.0
      %145 = vmatpush.msra.mxu0 0.0
      %146 = vmatpush.msra.mxu0 0.0
      %147 = vmatpush.msra.mxu0 %v106
      %148 = vmatpush.msra.mxu0 %v105
      %149 = vmatpush.msra.mxu0 %v104
      %150 = vmatpush.msra.mxu0 %v103
      %151 = vmatmul.f32.gmra.mxu0 %v127
      %v152 = vpop.f32.mrf.mxu0
      %v153 = vadd.f32 %v113, %v152
      %154 = vmatmul.f32.gmra.mxu0 %v130
      %v155 = vpop.f32.mrf.mxu0
      %v156 = vadd.f32 %v118, %v155
      %157 = vmatmul.f32.gmra.mxu0 %v133
      %v158 = vpop.f32.mrf.mxu0
      %v159 = vadd.f32 %v123, %v158
      %160 = vdwg.mxu0
      %v161 = vmax.f32 %v153, 0.0
      %v162 = vmax.f32 %v156, 0.0
      %v163 = vmax.f32 %v159, 0.0
      %v164 = vadd.f32 %v107, %v161
      %v165 = vadd.f32 %v108, %v162
      %v166 = vadd.f32 %v109, %v163
      %167 = vst [vmem:[#allocation2] sm:$0xff] %v164
      %168 = vst [vmem:[#allocation2 + $0x8] sm:$0xff] %v165
      %169 = vst [vmem:[#allocation2 + $0x10] sm:$0xf] %v166
    $region34: #{tpu_custom_call.1} parent=1 // loop_footer
      %s51 = sadd.s32 1, %s47
    $region35: #{tpu_custom_call.1} parent=1 // loop_footer_branch
      %46 = sbr.rel target = $region31
    $region36: #{tpu_custom_call.1} parent=1 // loop_exit
      _
    %v170 = vld [vmem:[#allocation2] sm:$0xff]
    %v171 = vld [vmem:[#allocation2 + $0x8] sm:$0xff]
    %v172 = vld [vmem:[#allocation2 + $0x10] sm:$0xf]
    %v173 = vld [vmem:[%s5] sm:$0xff]
    %v174 = vld [vmem:[%s5 + $0x8] sm:$0xff]
    %v175 = vld [vmem:[%s5 + $0x10] sm:$0xf]
    %177 = vset.pattern.permute.xlu0 0
    %178 = vperm.xlu0 %177, %v173
    %v179 = vpop.permute.xlu0 %178
    %182 = vset.pattern.permute.xlu0 0
    %183 = vperm.xlu0 %182, %v174
    %v184 = vpop.permute.xlu0 %183
    %187 = vset.pattern.permute.xlu0 0
    %188 = vperm.xlu0 %187, %v175
    %v189 = vpop.permute.xlu0 %188
    %v191 = vmul.f32 %v170, %v179
    %v192 = vmul.f32 %v171, %v184
    %v193 = vmul.f32 %v172, %v189
    %v194 = vadd.f32 %v191, %v192
    %vm195 = vcmask 1043456
    %v196 = vsel %vm195, %v193, 0.0
    %v197 = vadd.f32 %v194, %v196
    %v198 = vrot.slane %v197, 4
    %v199 = vadd.f32 %v197, %v198
    %v200 = vrot.slane %v199, 2
    %v201 = vadd.f32 %v199, %v200
    %v202 = vrot.slane %v201, 1
    %v203 = vadd.f32 %v201, %v202
    %v204 = vld [vmem:[#allocation3] sm:$0x1]
    %206 = vset.pattern.permute.xlu0 0
    %207 = vperm.xlu0 %206, %v204
    %v208 = vpop.permute.xlu0 %207
    %v210 = vperm.slane %v208, 0
    %v211 = vadd.f32 %v203, %v210
    %212 = vst [vmem:[#allocation4] sm:$0x1] %v211
    // Predicated region
    $region37: #{tpu_custom_call.1} parent=1 // pred_check
      _
    $region38: #{tpu_custom_call.1} parent=1 // pred_check_branch
      %214 = sbr.rel (0) target = $region40
    $region39: #{tpu_custom_call.1} parent=1 // pred_region
      %216 = vsyncadd [#allocation5], 0
      %s218 = sshll.u32 [#allocation4], 4
      %s219 = int_to_ptr.vmem [resolvable:$true] %s218
      %s220 = sshll.u32 %s7, 4
      %s221 = int_to_ptr.hbm [resolvable:$true] %s220
      %223 = dma.vmem_to_hbm [thread:$0]  %s219, 16, %s221, [#allocation5]
    $region40: #{tpu_custom_call.1} parent=1 // pred_fallthru
      _
    // Predicated region
    $region41: #{tpu_custom_call.1} parent=1 // pred_check
      _
    $region42: #{tpu_custom_call.1} parent=1 // pred_check_branch
      %225 = sbr.rel (0) target = $region44
    $region43: #{tpu_custom_call.1} parent=1 // pred_region
      %227 = dma.done [#allocation5], 16
    $region44: #{tpu_custom_call.1} parent=1 // pred_fallthru
      _
    %228 = vsyncpa [#allocation5], 1

</llo_original>
